<compile_context>
chip_gen: v7x
topology: tpu7x:2x2x1
jax: 0.10.0
libtpu: 0.0.40
codegen_flags: <defaults>
</compile_context>

<pallas_src>
import jax
import jax.numpy as jnp
from jax.experimental import pallas as pl
from jax.experimental.pallas import tpu as pltpu

H = 128  # padded lane width used for every hidden / head dimension


def _round_up(x, m):
    return ((x + m - 1) // m) * m


def dueling_q_kernel(x_ref, w1_ref, wslab_ref, b_ref, qraw_ref, adv_ref):
    """One batch tile: fused 3-layer trunk + value / advantage heads."""
    x = x_ref[...].astype(jnp.float32)

    # Static slices of the packed weight slab; offsets are multiples of 128,
    # so no (8,128) tile-boundary crossing / relayout.
    w2 = wslab_ref[0 * H:1 * H, :]
    w3 = wslab_ref[1 * H:2 * H, :]
    wv1 = wslab_ref[2 * H:3 * H, :]
    wv2 = wslab_ref[3 * H:4 * H, :]   # value column replicated across 128 lanes
    wa1 = wslab_ref[4 * H:5 * H, :]
    wa2 = wslab_ref[5 * H:6 * H, :]   # columns >= action_size are zero

    b = b_ref[...]                    # (8, 128) bias slab, loaded once per tile
    b1, b2, b3 = b[0:1, :], b[1:2, :], b[2:3, :]
    bv1, bv2, ba1, ba2 = b[3:4, :], b[4:5, :], b[5:6, :], b[6:7, :]

    h1 = jnp.maximum(jnp.dot(x, w1_ref[...], preferred_element_type=jnp.float32) + b1, 0.0)
    h2 = jnp.maximum(jnp.dot(h1, w2, preferred_element_type=jnp.float32) + b2, 0.0)
    h3 = jnp.maximum(jnp.dot(h2, w3, preferred_element_type=jnp.float32) + b3, 0.0)

    hv = jnp.maximum(jnp.dot(h3, wv1, preferred_element_type=jnp.float32) + bv1, 0.0)
    ha = jnp.maximum(jnp.dot(h3, wa1, preferred_element_type=jnp.float32) + ba1, 0.0)

    v = jnp.dot(hv, wv2, preferred_element_type=jnp.float32) + bv2  # every lane == value
    a = jnp.dot(ha, wa2, preferred_element_type=jnp.float32) + ba2  # lanes >= A are zero

    adv_ref[...] = a
    qraw_ref[...] = v + a


def dueling_q_forward(state, packed, action_size, *, max_batch_tile=512):
    """state: (B, state_size) f32.  packed: dict from pack_params()."""
    w1p, wslab, bslab = packed["w1p"], packed["wslab"], packed["bslab"]
    B, S = state.shape
    assert w1p.shape[0] == S

    # Batch tile: multiple of 8 sublanes, capped at 512 rows.  With f32 and
    # 128-wide hiddens a 512-row tile is well under 2 MiB of live VMEM, safe
    # against the v7x 64 MiB (32 MiB scoped) budget while large enough to
    # amortize the ~0.35 us per-step overhead.
    tile_b = min(max_batch_tile, _round_up(B, 8))
    b_pad = _round_up(B, tile_b)
    if b_pad != B:
        state = jnp.pad(state, ((0, b_pad - B), (0, 0)))
    grid_b = b_pad // tile_b

    out_shapes = (
        jax.ShapeDtypeStruct((b_pad, H), jnp.float32),  # value + advantage
        jax.ShapeDtypeStruct((b_pad, H), jnp.float32),  # advantage (padded lanes zero)
    )

    q_raw, adv = pl.pallas_call(
        dueling_q_kernel,
        out_shape=out_shapes,
        grid=(grid_b,),
        in_specs=[
            pl.BlockSpec((tile_b, S), lambda i: (i, 0)),   # batch-tiled state
            pl.BlockSpec(w1p.shape, lambda i: (0, 0)),     # weights resident across grid
            pl.BlockSpec(wslab.shape, lambda i: (0, 0)),
            pl.BlockSpec(bslab.shape, lambda i: (0, 0)),
        ],
        out_specs=(
            pl.BlockSpec((tile_b, H), lambda i: (i, 0)),
            pl.BlockSpec((tile_b, H), lambda i: (i, 0)),
        ),
        compiler_params=pltpu.CompilerParams(
            dimension_semantics=("parallel",),
        ),
    )(state, w1p, wslab, bslab)

    # Global (scalar) advantage mean over real rows/cols — exactly torch's
    # `advantage.mean()`; it crosses batch tiles, so done in the wrapper.
    adv_real = adv[:B, :action_size]
    return q_raw[:B, :action_size] - jnp.mean(adv_real)


def init_params(key, state_size, action_size, fc1_units=64, fc2_units=64, fc3_units=64):
    """nn.Linear-style init U(-1/sqrt(fan_in), 1/sqrt(fan_in)); weights stored (in, out)."""
    keys = jax.random.split(key, 14)

    def linear(kw, kb, fan_in, fan_out):
        bound = 1.0 / jnp.sqrt(jnp.float32(fan_in))
        w = jax.random.uniform(kw, (fan_in, fan_out), jnp.float32, -bound, bound)
        b = jax.random.uniform(kb, (fan_out,), jnp.float32, -bound, bound)
        return w, b

    p = {}
    p["w1"], p["b1"] = linear(keys[0], keys[1], state_size, fc1_units)
    p["w2"], p["b2"] = linear(keys[2], keys[3], fc1_units, fc2_units)
    p["w3"], p["b3"] = linear(keys[4], keys[5], fc2_units, fc3_units)
    p["wv1"], p["bv1"] = linear(keys[6], keys[7], fc3_units, 128)
    p["wv2"], p["bv2"] = linear(keys[8], keys[9], 128, 1)
    p["wa1"], p["ba1"] = linear(keys[10], keys[11], fc3_units, 128)
    p["wa2"], p["ba2"] = linear(keys[12], keys[13], 128, action_size)
    return p


def pack_params(params):
    """Zero-pad every feature dim to 128 lanes and pack into 3 dense buffers.

    Padded weight rows/cols and bias lanes are exactly zero, so padded hidden
    lanes stay 0 through ReLU and padded output lanes carry no signal (they are
    sliced off in the wrapper) -> identical math to the un-padded network.
    """
    def pad2(w):
        r, c = w.shape
        return jnp.pad(w, ((0, H - r), (0, H - c)))

    def pad_b(b):
        return jnp.pad(b, (0, H - b.shape[0]))

    w1p = jnp.pad(params["w1"], ((0, 0), (0, H - params["w1"].shape[1])))

    wv2_rep = jnp.broadcast_to(params["wv2"], (H, H))            # (128,1) -> every column
    bv2_rep = jnp.full((H,), params["bv2"][0], jnp.float32)

    wslab = jnp.concatenate(
        [pad2(params["w2"]), pad2(params["w3"]),
         pad2(params["wv1"]), wv2_rep,
         pad2(params["wa1"]), pad2(params["wa2"])], axis=0)      # (768, 128)

    bslab = jnp.stack(
        [pad_b(params["b1"]), pad_b(params["b2"]), pad_b(params["b3"]),
         pad_b(params["bv1"]), bv2_rep,
         pad_b(params["ba1"]), pad_b(params["ba2"]),
         jnp.zeros((H,), jnp.float32)], axis=0)                  # (8, 128)

    return {"w1p": w1p, "wslab": wslab, "bslab": bslab}


def dueling_q_ref(state, params):
    """Pure-JAX reference matching the PyTorch forward exactly."""
    relu = lambda t: jnp.maximum(t, 0.0)
    h = relu(state @ params["w1"] + params["b1"])
    h = relu(h @ params["w2"] + params["b2"])
    h = relu(h @ params["w3"] + params["b3"])
    value = relu(h @ params["wv1"] + params["bv1"]) @ params["wv2"] + params["bv2"]
    adv = relu(h @ params["wa1"] + params["ba1"]) @ params["wa2"] + params["ba2"]
    return value + adv - jnp.mean(adv)


if __name__ == "__main__":
    key = jax.random.PRNGKey(0)
    k_params, k_state = jax.random.split(key)

    batch = 2
    state_size = 8
    action_size = 4

    params = init_params(k_params, state_size, action_size)
    packed = pack_params(params)
    state = jax.random.normal(k_state, (batch, state_size), jnp.float32)

    out = dueling_q_forward(state, packed, action_size)
    out = jax.block_until_ready(out)

    ref = dueling_q_ref(state, params)
    assert out.shape == (batch, action_size), out.shape
    err = jnp.max(jnp.abs(out - ref))
    assert jnp.allclose(out, ref, atol=1e-3, rtol=1e-3), f"mismatch vs reference (max err {err})"

    print("KERNEL_OK")
</pallas_src>

<mosaic_0001>
module attributes {stable_mosaic.version = 11 : i64} {
  func.func @dueling_q_kernel(%arg0: i32, %arg1: memref<8x8xf32, #tpu.memory_space<vmem>>, %arg2: memref<8x128xf32, #tpu.memory_space<vmem>>, %arg3: memref<768x128xf32, #tpu.memory_space<vmem>>, %arg4: memref<8x128xf32, #tpu.memory_space<vmem>>, %arg5: memref<8x128xf32, #tpu.memory_space<vmem>>, %arg6: memref<8x128xf32, #tpu.memory_space<vmem>>) attributes {dimension_semantics = [#tpu.dimension_semantics<parallel>], iteration_bounds = array<i64: 1>, scalar_prefetch = 0 : i64, scratch_operands = 0 : i64, tpu.core_type = #tpu.core_type<tc>, window_params = [{transform_indices = @transform_0, window_bounds = array<i64: 8, 8>}, {pipeline_mode = #tpu.pipeline_mode<synchronous>, transform_indices = @transform_1, window_bounds = array<i64: 8, 128>}, {pipeline_mode = #tpu.pipeline_mode<synchronous>, transform_indices = @transform_2, window_bounds = array<i64: 768, 128>}, {pipeline_mode = #tpu.pipeline_mode<synchronous>, transform_indices = @transform_3, window_bounds = array<i64: 8, 128>}, {transform_indices = @transform_4, window_bounds = array<i64: 8, 128>}, {transform_indices = @transform_5, window_bounds = array<i64: 8, 128>}]} {
    %c0 = arith.constant 0 : index
    %c0_0 = arith.constant 0 : index
    %0 = vector.load %arg1[%c0, %c0_0] : memref<8x8xf32, #tpu.memory_space<vmem>>, vector<8x8xf32>
    %c0_1 = arith.constant 0 : index
    %c0_2 = arith.constant 0 : index
    %1 = vector.load %arg3[%c0_1, %c0_2] : memref<768x128xf32, #tpu.memory_space<vmem>>, vector<128x128xf32>
    %c128 = arith.constant 128 : index
    %c0_3 = arith.constant 0 : index
    %2 = vector.load %arg3[%c128, %c0_3] : memref<768x128xf32, #tpu.memory_space<vmem>>, vector<128x128xf32>
    %c256 = arith.constant 256 : index
    %c0_4 = arith.constant 0 : index
    %3 = vector.load %arg3[%c256, %c0_4] : memref<768x128xf32, #tpu.memory_space<vmem>>, vector<128x128xf32>
    %c384 = arith.constant 384 : index
    %c0_5 = arith.constant 0 : index
    %4 = vector.load %arg3[%c384, %c0_5] : memref<768x128xf32, #tpu.memory_space<vmem>>, vector<128x128xf32>
    %c512 = arith.constant 512 : index
    %c0_6 = arith.constant 0 : index
    %5 = vector.load %arg3[%c512, %c0_6] : memref<768x128xf32, #tpu.memory_space<vmem>>, vector<128x128xf32>
    %c640 = arith.constant 640 : index
    %c0_7 = arith.constant 0 : index
    %6 = vector.load %arg3[%c640, %c0_7] : memref<768x128xf32, #tpu.memory_space<vmem>>, vector<128x128xf32>
    %c0_8 = arith.constant 0 : index
    %c0_9 = arith.constant 0 : index
    %7 = vector.load %arg4[%c0_8, %c0_9] : memref<8x128xf32, #tpu.memory_space<vmem>>, vector<8x128xf32>
    %8 = vector.extract_strided_slice %7 {offsets = [0, 0], sizes = [1, 128], strides = [1, 1]} : vector<8x128xf32> to vector<1x128xf32>
    %9 = vector.extract_strided_slice %7 {offsets = [1, 0], sizes = [1, 128], strides = [1, 1]} : vector<8x128xf32> to vector<1x128xf32>
    %10 = vector.extract_strided_slice %7 {offsets = [2, 0], sizes = [1, 128], strides = [1, 1]} : vector<8x128xf32> to vector<1x128xf32>
    %11 = vector.extract_strided_slice %7 {offsets = [3, 0], sizes = [1, 128], strides = [1, 1]} : vector<8x128xf32> to vector<1x128xf32>
    %12 = vector.extract_strided_slice %7 {offsets = [4, 0], sizes = [1, 128], strides = [1, 1]} : vector<8x128xf32> to vector<1x128xf32>
    %13 = vector.extract_strided_slice %7 {offsets = [5, 0], sizes = [1, 128], strides = [1, 1]} : vector<8x128xf32> to vector<1x128xf32>
    %14 = vector.extract_strided_slice %7 {offsets = [6, 0], sizes = [1, 128], strides = [1, 1]} : vector<8x128xf32> to vector<1x128xf32>
    %c0_10 = arith.constant 0 : index
    %c0_11 = arith.constant 0 : index
    %15 = vector.load %arg2[%c0_10, %c0_11] : memref<8x128xf32, #tpu.memory_space<vmem>>, vector<8x128xf32>
    %cst = arith.constant dense<0.000000e+00> : vector<8x128xf32>
    %16 = tpu.matmul %0, %15, %cst {dimension_numbers = #tpu.dot_dimension_numbers<[1], [0], [0], [1], [0, 0, 1, 1], [], []>} : vector<8x8xf32>, vector<8x128xf32>, vector<8x128xf32> -> vector<8x128xf32>
    %17 = vector.broadcast %8 : vector<1x128xf32> to vector<8x128xf32>
    %18 = arith.addf %16, %17 : vector<8x128xf32>
    %cst_12 = arith.constant 0.000000e+00 : f32
    %19 = vector.broadcast %cst_12 : f32 to vector<8x128xf32>
    %20 = arith.maximumf %18, %19 : vector<8x128xf32>
    %cst_13 = arith.constant dense<0.000000e+00> : vector<8x128xf32>
    %21 = tpu.matmul %20, %1, %cst_13 {dimension_numbers = #tpu.dot_dimension_numbers<[1], [0], [0], [1], [0, 0, 1, 1], [], []>} : vector<8x128xf32>, vector<128x128xf32>, vector<8x128xf32> -> vector<8x128xf32>
    %22 = vector.broadcast %9 : vector<1x128xf32> to vector<8x128xf32>
    %23 = arith.addf %21, %22 : vector<8x128xf32>
    %cst_14 = arith.constant 0.000000e+00 : f32
    %24 = vector.broadcast %cst_14 : f32 to vector<8x128xf32>
    %25 = arith.maximumf %23, %24 : vector<8x128xf32>
    %cst_15 = arith.constant dense<0.000000e+00> : vector<8x128xf32>
    %26 = tpu.matmul %25, %2, %cst_15 {dimension_numbers = #tpu.dot_dimension_numbers<[1], [0], [0], [1], [0, 0, 1, 1], [], []>} : vector<8x128xf32>, vector<128x128xf32>, vector<8x128xf32> -> vector<8x128xf32>
    %27 = vector.broadcast %10 : vector<1x128xf32> to vector<8x128xf32>
    %28 = arith.addf %26, %27 : vector<8x128xf32>
    %cst_16 = arith.constant 0.000000e+00 : f32
    %29 = vector.broadcast %cst_16 : f32 to vector<8x128xf32>
    %30 = arith.maximumf %28, %29 : vector<8x128xf32>
    %cst_17 = arith.constant dense<0.000000e+00> : vector<8x128xf32>
    %31 = tpu.matmul %30, %3, %cst_17 {dimension_numbers = #tpu.dot_dimension_numbers<[1], [0], [0], [1], [0, 0, 1, 1], [], []>} : vector<8x128xf32>, vector<128x128xf32>, vector<8x128xf32> -> vector<8x128xf32>
    %32 = vector.broadcast %11 : vector<1x128xf32> to vector<8x128xf32>
    %33 = arith.addf %31, %32 : vector<8x128xf32>
    %cst_18 = arith.constant 0.000000e+00 : f32
    %34 = vector.broadcast %cst_18 : f32 to vector<8x128xf32>
    %35 = arith.maximumf %33, %34 : vector<8x128xf32>
    %cst_19 = arith.constant dense<0.000000e+00> : vector<8x128xf32>
    %36 = tpu.matmul %30, %5, %cst_19 {dimension_numbers = #tpu.dot_dimension_numbers<[1], [0], [0], [1], [0, 0, 1, 1], [], []>} : vector<8x128xf32>, vector<128x128xf32>, vector<8x128xf32> -> vector<8x128xf32>
    %37 = vector.broadcast %13 : vector<1x128xf32> to vector<8x128xf32>
    %38 = arith.addf %36, %37 : vector<8x128xf32>
    %cst_20 = arith.constant 0.000000e+00 : f32
    %39 = vector.broadcast %cst_20 : f32 to vector<8x128xf32>
    %40 = arith.maximumf %38, %39 : vector<8x128xf32>
    %cst_21 = arith.constant dense<0.000000e+00> : vector<8x128xf32>
    %41 = tpu.matmul %35, %4, %cst_21 {dimension_numbers = #tpu.dot_dimension_numbers<[1], [0], [0], [1], [0, 0, 1, 1], [], []>} : vector<8x128xf32>, vector<128x128xf32>, vector<8x128xf32> -> vector<8x128xf32>
    %42 = vector.broadcast %12 : vector<1x128xf32> to vector<8x128xf32>
    %43 = arith.addf %41, %42 : vector<8x128xf32>
    %cst_22 = arith.constant dense<0.000000e+00> : vector<8x128xf32>
    %44 = tpu.matmul %40, %6, %cst_22 {dimension_numbers = #tpu.dot_dimension_numbers<[1], [0], [0], [1], [0, 0, 1, 1], [], []>} : vector<8x128xf32>, vector<128x128xf32>, vector<8x128xf32> -> vector<8x128xf32>
    %45 = vector.broadcast %14 : vector<1x128xf32> to vector<8x128xf32>
    %46 = arith.addf %44, %45 : vector<8x128xf32>
    %c0_23 = arith.constant 0 : index
    %c0_24 = arith.constant 0 : index
    %47 = vector.load %arg6[%c0_23, %c0_24] : memref<8x128xf32, #tpu.memory_space<vmem>>, vector<8x128xf32>
    tpu.vector_store %arg6[%c0_23, %c0_24], %46 {strides = array<i32>} : memref<8x128xf32, #tpu.memory_space<vmem>>, vector<8x128xf32>,
    %48 = arith.addf %43, %46 : vector<8x128xf32>
    %c0_25 = arith.constant 0 : index
    %c0_26 = arith.constant 0 : index
    %49 = vector.load %arg5[%c0_25, %c0_26] : memref<8x128xf32, #tpu.memory_space<vmem>>, vector<8x128xf32>
    tpu.vector_store %arg5[%c0_25, %c0_26], %48 {strides = array<i32>} : memref<8x128xf32, #tpu.memory_space<vmem>>, vector<8x128xf32>,
    return
  }
  func.func @transform_0(%arg0: i32) -> (i32, i32) {
    %c0_i32 = arith.constant 0 : i32
    %c0_i32_0 = arith.constant 0 : i32
    return %arg0, %c0_i32 : i32, i32
  }
  func.func @transform_1(%arg0: i32) -> (i32, i32) {
    %c0_i32 = arith.constant 0 : i32
    %c0_i32_0 = arith.constant 0 : i32
    %c0_i32_1 = arith.constant 0 : i32
    return %c0_i32, %c0_i32_0 : i32, i32
  }
  func.func @transform_2(%arg0: i32) -> (i32, i32) {
    %c0_i32 = arith.constant 0 : i32
    %c0_i32_0 = arith.constant 0 : i32
    %c0_i32_1 = arith.constant 0 : i32
    return %c0_i32, %c0_i32_0 : i32, i32
  }
  func.func @transform_3(%arg0: i32) -> (i32, i32) {
    %c0_i32 = arith.constant 0 : i32
    %c0_i32_0 = arith.constant 0 : i32
    %c0_i32_1 = arith.constant 0 : i32
    return %c0_i32, %c0_i32_0 : i32, i32
  }
  func.func @transform_4(%arg0: i32) -> (i32, i32) {
    %c0_i32 = arith.constant 0 : i32
    %c0_i32_0 = arith.constant 0 : i32
    return %arg0, %c0_i32 : i32, i32
  }
  func.func @transform_5(%arg0: i32) -> (i32, i32) {
    %c0_i32 = arith.constant 0 : i32
    %c0_i32_0 = arith.constant 0 : i32
    return %arg0, %c0_i32 : i32, i32
  }
}

</mosaic_0001>

<llo_original>
// kernel: tpu_custom_call.1
$region0: #{tpu_custom_call.1}
  #allocation0 [shape = 'u32[]', space=smem, size = 0x4, offset = 0x4, fixed_abs, tag = 'smem constant byte address 0x4 - core index']
  #allocation1 [shape = 'u32[144,128]{1,0:T(1,128)}', space=vmem, size = 0x12000, scoped, tag = 'internal scratch']
  %s0 = inlined_call_operand.hbm [shape: f32[8,8], index: 0, kind: input, shape index: {}]
  %s1 = inlined_call_operand.hbm [shape: f32[8,128], index: 1, kind: input, shape index: {}]
  %s2 = inlined_call_operand.hbm [shape: f32[768,128], index: 2, kind: input, shape index: {}]
  %s3 = inlined_call_operand.vmem [shape: f32[8,128], index: 3, kind: input, shape index: {}]
  %s4 = inlined_call_operand.hbm [shape: f32[8,128], index: 4, kind: output, shape index: {0}]
  %s5 = inlined_call_operand.hbm [shape: f32[8,128], index: 5, kind: output, shape index: {1}]
  %6 = xla_tuple %s4, %s5
  %s7 = sld [smem:[#allocation0]]
  $region46: #{tpu_custom_call.1} parent=0
    _
  %s9 = ssub.s32 1, %s7
  %s10 = scalar_select 0, %s9, %s7
  $region1: #{tpu_custom_call.1} parent=0
    #allocation2 [shape = 'u8[4096]{0}', space=vmem, size = 0x1000, scoped, tag = 'input window, operand 0, single buffered']
    #allocation3 [shape = 's32[1]{0}', space=sflag, size = 0x4, scoped, tag = 'scoped memory for tpu_custom_call.1']
    #allocation4 [shape = 's32[1]{0}', space=sflag, size = 0x4, scoped, tag = 'scoped memory for tpu_custom_call.1']
    #allocation5 [shape = 'u8[4096]{0}', space=vmem, size = 0x1000, scoped, tag = 'input window, operand 1, single buffered']
    #allocation6 [shape = 's32[1]{0}', space=sflag, size = 0x4, scoped, tag = 'scoped memory for tpu_custom_call.1']
    #allocation7 [shape = 'u8[393216]{0}', space=vmem, size = 0x60000, scoped, tag = 'input window, operand 2, single buffered']
    #allocation8 [shape = 'u8[4096]{0}', space=vmem, size = 0x1000, scoped, tag = 'output window, operand 0, single buffered']
    #allocation9 [shape = 'u8[4096]{0}', space=vmem, size = 0x1000, scoped, tag = 'output window, operand 1, single buffered']
    #allocation10 [shape = 's32[1]{0}', space=sflag, size = 0x4, scoped, tag = 'scoped memory for tpu_custom_call.1']
    %11 = vsyncpa [#allocation3], 0
    %12 = vsyncpa [#allocation6], 0
    %13 = vsyncpa [#allocation4], 0
    %14 = vsyncpa [#allocation10], 0
    // Predicated region
    $region2: #{tpu_custom_call.1} parent=1 // pred_check
      _
    $region3: #{tpu_custom_call.1} parent=1 // pred_check_branch
      %16 = sbr.rel (0) target = $region5
    $region4: #{tpu_custom_call.1} parent=1 // pred_region
      %s18 = ssub.s32 128, 128
      %19 = vsyncadd [#allocation3], %s18
      %s21 = sshll.u32 [#allocation2], 4
      %s22 = int_to_ptr.vmem [resolvable:$true] %s21
      %24 = dma.hbm_to_vmem [thread:$0]  %s0, 128, %s22, [#allocation3]
    $region5: #{tpu_custom_call.1} parent=1 // pred_fallthru
      _
    // Predicated region
    $region6: #{tpu_custom_call.1} parent=1 // pred_check
      _
    $region7: #{tpu_custom_call.1} parent=1 // pred_check_branch
      %26 = sbr.rel (0) target = $region9
    $region8: #{tpu_custom_call.1} parent=1 // pred_region
      %s28 = ssub.s32 128, 128
      %29 = vsyncadd [#allocation6], %s28
      %s31 = sshll.u32 [#allocation5], 4
      %s32 = int_to_ptr.vmem [resolvable:$true] %s31
      %34 = dma.hbm_to_vmem [thread:$0]  %s1, 128, %s32, [#allocation6]
    $region9: #{tpu_custom_call.1} parent=1 // pred_fallthru
      _
    // Predicated region
    $region10: #{tpu_custom_call.1} parent=1 // pred_check
      _
    $region11: #{tpu_custom_call.1} parent=1 // pred_check_branch
      %36 = sbr.rel (0) target = $region13
    $region12: #{tpu_custom_call.1} parent=1 // pred_region
      %s38 = ssub.s32 12288, 12288
      %39 = vsyncadd [#allocation6], %s38
      %s40 = sshll.u32 [#allocation7], 4
      %s41 = int_to_ptr.vmem [resolvable:$true] %s40
      %46 = dma.hbm_to_vmem [thread:$0]  %s2, 12288, %s41, [#allocation6], 128, 128, 8
    $region13: #{tpu_custom_call.1} parent=1 // pred_fallthru
      _
    // Predicated region
    $region14: #{tpu_custom_call.1} parent=1 // pred_check
      _
    $region15: #{tpu_custom_call.1} parent=1 // pred_check_branch
      %48 = sbr.rel (0) target = $region17
    $region16: #{tpu_custom_call.1} parent=1 // pred_region
      _
    $region17: #{tpu_custom_call.1} parent=1 // pred_fallthru
      _
    // Predicated region
    $region18: #{tpu_custom_call.1} parent=1 // pred_check
      _
    $region19: #{tpu_custom_call.1} parent=1 // pred_check_branch
      %50 = sbr.rel (0) target = $region21
    $region20: #{tpu_custom_call.1} parent=1 // pred_region
      %51 = dma.done [#allocation3], 128
    $region21: #{tpu_custom_call.1} parent=1 // pred_fallthru
      _
    // Predicated region
    $region22: #{tpu_custom_call.1} parent=1 // pred_check
      _
    $region23: #{tpu_custom_call.1} parent=1 // pred_check_branch
      %53 = sbr.rel (0) target = $region25
    $region24: #{tpu_custom_call.1} parent=1 // pred_region
      %54 = dma.done [#allocation6], 128
    $region25: #{tpu_custom_call.1} parent=1 // pred_fallthru
      _
    // Predicated region
    $region26: #{tpu_custom_call.1} parent=1 // pred_check
      _
    $region27: #{tpu_custom_call.1} parent=1 // pred_check_branch
      %56 = sbr.rel (0) target = $region29
    $region28: #{tpu_custom_call.1} parent=1 // pred_region
      %57 = dma.done [#allocation6], 12288
    $region29: #{tpu_custom_call.1} parent=1 // pred_fallthru
      _
    %v58 = vld [vmem:[#allocation2] sm:$0xff]
    %v59 = vld [vmem:[#allocation7] sm:$0xff]
    %v60 = vld [vmem:[#allocation7 + $0x8] sm:$0xff]
    %v61 = vld [vmem:[#allocation7 + $0x10] sm:$0xff]
    %v62 = vld [vmem:[#allocation7 + $0x18] sm:$0xff]
    %v63 = vld [vmem:[#allocation7 + $0x20] sm:$0xff]
    %v64 = vld [vmem:[#allocation7 + $0x28] sm:$0xff]
    %v65 = vld [vmem:[#allocation7 + $0x30] sm:$0xff]
    %v66 = vld [vmem:[#allocation7 + $0x38] sm:$0xff]
    %v67 = vld [vmem:[#allocation7 + $0x40] sm:$0xff]
    %v68 = vld [vmem:[#allocation7 + $0x48] sm:$0xff]
    %v69 = vld [vmem:[#allocation7 + $0x50] sm:$0xff]
    %v70 = vld [vmem:[#allocation7 + $0x58] sm:$0xff]
    %v71 = vld [vmem:[#allocation7 + $0x60] sm:$0xff]
    %v72 = vld [vmem:[#allocation7 + $0x68] sm:$0xff]
    %v73 = vld [vmem:[#allocation7 + $0x70] sm:$0xff]
    %v74 = vld [vmem:[#allocation7 + $0x78] sm:$0xff]
    %v75 = vld [vmem:[#allocation7 + $0x80] sm:$0xff]
    %v76 = vld [vmem:[#allocation7 + $0x88] sm:$0xff]
    %v77 = vld [vmem:[#allocation7 + $0x90] sm:$0xff]
    %v78 = vld [vmem:[#allocation7 + $0x98] sm:$0xff]
    %v79 = vld [vmem:[#allocation7 + $0xa0] sm:$0xff]
    %v80 = vld [vmem:[#allocation7 + $0xa8] sm:$0xff]
    %v81 = vld [vmem:[#allocation7 + $0xb0] sm:$0xff]
    %v82 = vld [vmem:[#allocation7 + $0xb8] sm:$0xff]
    %v83 = vld [vmem:[#allocation7 + $0xc0] sm:$0xff]
    %v84 = vld [vmem:[#allocation7 + $0xc8] sm:$0xff]
    %v85 = vld [vmem:[#allocation7 + $0xd0] sm:$0xff]
    %v86 = vld [vmem:[#allocation7 + $0xd8] sm:$0xff]
    %v87 = vld [vmem:[#allocation7 + $0xe0] sm:$0xff]
    %v88 = vld [vmem:[#allocation7 + $0xe8] sm:$0xff]
    %v89 = vld [vmem:[#allocation7 + $0xf0] sm:$0xff]
    %v90 = vld [vmem:[#allocation7 + $0xf8] sm:$0xff]
    %v91 = vld [vmem:[#allocation7 + $0x100] sm:$0xff]
    %v92 = vld [vmem:[#allocation7 + $0x108] sm:$0xff]
    %v93 = vld [vmem:[#allocation7 + $0x110] sm:$0xff]
    %v94 = vld [vmem:[#allocation7 + $0x118] sm:$0xff]
    %v95 = vld [vmem:[#allocation7 + $0x120] sm:$0xff]
    %v96 = vld [vmem:[#allocation7 + $0x128] sm:$0xff]
    %v97 = vld [vmem:[#allocation7 + $0x130] sm:$0xff]
    %v98 = vld [vmem:[#allocation7 + $0x138] sm:$0xff]
    %v99 = vld [vmem:[#allocation7 + $0x140] sm:$0xff]
    %v100 = vld [vmem:[#allocation7 + $0x148] sm:$0xff]
    %v101 = vld [vmem:[#allocation7 + $0x150] sm:$0xff]
    %v102 = vld [vmem:[#allocation7 + $0x158] sm:$0xff]
    %v103 = vld [vmem:[#allocation7 + $0x160] sm:$0xff]
    %v104 = vld [vmem:[#allocation7 + $0x168] sm:$0xff]
    %v105 = vld [vmem:[#allocation7 + $0x170] sm:$0xff]
    %v106 = vld [vmem:[#allocation7 + $0x178] sm:$0xff]
    %v107 = vld [vmem:[#allocation7 + $0x180] sm:$0xff]
    %v108 = vld [vmem:[#allocation7 + $0x188] sm:$0xff]
    %v109 = vld [vmem:[#allocation7 + $0x190] sm:$0xff]
    %v110 = vld [vmem:[#allocation7 + $0x198] sm:$0xff]
    %v111 = vld [vmem:[#allocation7 + $0x1a0] sm:$0xff]
    %v112 = vld [vmem:[#allocation7 + $0x1a8] sm:$0xff]
    %v113 = vld [vmem:[#allocation7 + $0x1b0] sm:$0xff]
    %v114 = vld [vmem:[#allocation7 + $0x1b8] sm:$0xff]
    %v115 = vld [vmem:[#allocation7 + $0x1c0] sm:$0xff]
    %v116 = vld [vmem:[#allocation7 + $0x1c8] sm:$0xff]
    %v117 = vld [vmem:[#allocation7 + $0x1d0] sm:$0xff]
    %v118 = vld [vmem:[#allocation7 + $0x1d8] sm:$0xff]
    %v119 = vld [vmem:[#allocation7 + $0x1e0] sm:$0xff]
    %v120 = vld [vmem:[#allocation7 + $0x1e8] sm:$0xff]
    %v121 = vld [vmem:[#allocation7 + $0x1f0] sm:$0xff]
    %v122 = vld [vmem:[#allocation7 + $0x1f8] sm:$0xff]
    %v123 = vld [vmem:[#allocation7 + $0x200] sm:$0xff]
    %v124 = vld [vmem:[#allocation7 + $0x208] sm:$0xff]
    %v125 = vld [vmem:[#allocation7 + $0x210] sm:$0xff]
    %v126 = vld [vmem:[#allocation7 + $0x218] sm:$0xff]
    %v127 = vld [vmem:[#allocation7 + $0x220] sm:$0xff]
    %v128 = vld [vmem:[#allocation7 + $0x228] sm:$0xff]
    %v129 = vld [vmem:[#allocation7 + $0x230] sm:$0xff]
    %v130 = vld [vmem:[#allocation7 + $0x238] sm:$0xff]
    %v131 = vld [vmem:[#allocation7 + $0x240] sm:$0xff]
    %v132 = vld [vmem:[#allocation7 + $0x248] sm:$0xff]
    %v133 = vld [vmem:[#allocation7 + $0x250] sm:$0xff]
    %v134 = vld [vmem:[#allocation7 + $0x258] sm:$0xff]
    %v135 = vld [vmem:[#allocation7 + $0x260] sm:$0xff]
    %v136 = vld [vmem:[#allocation7 + $0x268] sm:$0xff]
    %v137 = vld [vmem:[#allocation7 + $0x270] sm:$0xff]
    %v138 = vld [vmem:[#allocation7 + $0x278] sm:$0xff]
    %v139 = vld [vmem:[#allocation7 + $0x280] sm:$0xff]
    %v140 = vld [vmem:[#allocation7 + $0x288] sm:$0xff]
    %v141 = vld [vmem:[#allocation7 + $0x290] sm:$0xff]
    %v142 = vld [vmem:[#allocation7 + $0x298] sm:$0xff]
    %v143 = vld [vmem:[#allocation7 + $0x2a0] sm:$0xff]
    %v144 = vld [vmem:[#allocation7 + $0x2a8] sm:$0xff]
    %v145 = vld [vmem:[#allocation7 + $0x2b0] sm:$0xff]
    %v146 = vld [vmem:[#allocation7 + $0x2b8] sm:$0xff]
    %v147 = vld [vmem:[#allocation7 + $0x2c0] sm:$0xff]
    %v148 = vld [vmem:[#allocation7 + $0x2c8] sm:$0xff]
    %v149 = vld [vmem:[#allocation7 + $0x2d0] sm:$0xff]
    %v150 = vld [vmem:[#allocation7 + $0x2d8] sm:$0xff]
    %v151 = vld [vmem:[#allocation7 + $0x2e0] sm:$0xff]
    %v152 = vld [vmem:[#allocation7 + $0x2e8] sm:$0xff]
    %v153 = vld [vmem:[#allocation7 + $0x2f0] sm:$0xff]
    %v154 = vld [vmem:[#allocation7 + $0x2f8] sm:$0xff]
    %v155 = vld [vmem:[%s3] sm:$0xff]
    %v156 = vld [vmem:[#allocation5] sm:$0xff]
    %v157 = vlaneseq
    %v158 = vshrl.u32 %v157, 7
    %v159 = vsub.s32 0, %v158
    %v160 = vrot.slane %v155, %v159
    %vm161 = vcmask 64512
    %v163 = vsel %vm161, %v58, 0
    %165 = vmatprep.subr.mxu0 0.0
    %166 = vmatpush1.msra.mxu0 %v156
    %167 = vmatprep.subr.mxu0 0.0
    %168 = vmatpush1.msra.mxu0 0.0
    %169 = vmatprep.subr.mxu0 0.0
    %170 = vmatpush1.msra.mxu0 0.0
    %171 = vmatprep.subr.mxu0 0.0
    %172 = vmatpush1.msra.mxu0 0.0
    %173 = vmatprep.subr.mxu0 0.0
    %174 = vmatpush1.msra.mxu0 0.0
    %175 = vmatprep.subr.mxu0 0.0
    %176 = vmatpush1.msra.mxu0 0.0
    %177 = vmatprep.subr.mxu0 0.0
    %178 = vmatpush1.msra.mxu0 0.0
    %179 = vmatprep.subr.mxu0 0.0
    %180 = vmatpush1.msra.mxu0 0.0
    %181 = vmatprep.subr.mxu0 0.0
    %182 = vmatpush1.msra.mxu0 0.0
    %183 = vmatprep.subr.mxu0 0.0
    %184 = vmatpush1.msra.mxu0 0.0
    %185 = vmatprep.subr.mxu0 0.0
    %186 = vmatpush1.msra.mxu0 0.0
    %187 = vmatprep.subr.mxu0 0.0
    %188 = vmatpush1.msra.mxu0 0.0
    %189 = vmatprep.subr.mxu0 0.0
    %190 = vmatpush1.msra.mxu0 0.0
    %191 = vmatprep.subr.mxu0 0.0
    %192 = vmatpush1.msra.mxu0 0.0
    %193 = vmatprep.subr.mxu0 0.0
    %194 = vmatpush1.msra.mxu0 0.0
    %195 = vmatprep.subr.mxu0 0.0
    %196 = vmatpush1.msra.mxu0 0.0
    %197 = vmatprep.subr.mxu0 0.0
    %198 = vmatpush1.msra.mxu0 0.0
    %199 = vmatprep.subr.mxu0 0.0
    %200 = vmatpush1.msra.mxu0 0.0
    %201 = vmatprep.subr.mxu0 0.0
    %202 = vmatpush1.msra.mxu0 0.0
    %203 = vmatprep.subr.mxu0 0.0
    %204 = vmatpush1.msra.mxu0 0.0
    %205 = vmatprep.subr.mxu0 0.0
    %206 = vmatpush1.msra.mxu0 0.0
    %207 = vmatprep.subr.mxu0 0.0
    %208 = vmatpush1.msra.mxu0 0.0
    %209 = vmatprep.subr.mxu0 0.0
    %210 = vmatpush1.msra.mxu0 0.0
    %211 = vmatprep.subr.mxu0 0.0
    %212 = vmatpush1.msra.mxu0 0.0
    %213 = vmatprep.subr.mxu0 0.0
    %214 = vmatpush1.msra.mxu0 0.0
    %215 = vmatprep.subr.mxu0 0.0
    %216 = vmatpush1.msra.mxu0 0.0
    %217 = vmatprep.subr.mxu0 0.0
    %218 = vmatpush1.msra.mxu0 0.0
    %219 = vmatprep.subr.mxu0 0.0
    %220 = vmatpush1.msra.mxu0 0.0
    %221 = vmatprep.subr.mxu0 0.0
    %222 = vmatpush1.msra.mxu0 0.0
    %223 = vmatprep.subr.mxu0 0.0
    %224 = vmatpush1.msra.mxu0 0.0
    %225 = vmatprep.subr.mxu0 0.0
    %226 = vmatpush1.msra.mxu0 0.0
    %227 = vmatprep.subr.mxu0 0.0
    %228 = vmatpush1.msra.mxu0 0.0
    %229 = vmatprep.mubr.f32.mxu0 0.0
    %230 = vmatmul.mubr.f32.gmra.mrb[0].mxu0 %v163
    %v231 = vpop.f32.mrb[0].mxu0
    %v232 = vadd.f32 %v160, %v231
    %v233 = vpop.f32.mrb[0].mxu0
    %234 = vdwg.mxu0
    %v235 = vmax.f32 %v232, 0.0
    %v236 = vlaneseq
    %v237 = vshrl.u32 %v236, 7
    %v238 = vsub.s32 1, %v237
    %v239 = vrot.slane %v155, %v238
    %240 = vmatprep.subr.mxu0 0.0
    %241 = vmatpush1.msra.mxu0 %v59
    %242 = vmatprep.subr.mxu0 0.0
    %243 = vmatpush1.msra.mxu0 %v60
    %244 = vmatprep.subr.mxu0 0.0
    %245 = vmatpush1.msra.mxu0 %v61
    %246 = vmatprep.subr.mxu0 0.0
    %247 = vmatpush1.msra.mxu0 %v62
    %248 = vmatprep.subr.mxu0 0.0
    %249 = vmatpush1.msra.mxu0 %v63
    %250 = vmatprep.subr.mxu0 0.0
    %251 = vmatpush1.msra.mxu0 %v64
    %252 = vmatprep.subr.mxu0 0.0
    %253 = vmatpush1.msra.mxu0 %v65
    %254 = vmatprep.subr.mxu0 0.0
    %255 = vmatpush1.msra.mxu0 %v66
    %256 = vmatprep.subr.mxu0 0.0
    %257 = vmatpush1.msra.mxu0 %v67
    %258 = vmatprep.subr.mxu0 0.0
    %259 = vmatpush1.msra.mxu0 %v68
    %260 = vmatprep.subr.mxu0 0.0
    %261 = vmatpush1.msra.mxu0 %v69
    %262 = vmatprep.subr.mxu0 0.0
    %263 = vmatpush1.msra.mxu0 %v70
    %264 = vmatprep.subr.mxu0 0.0
    %265 = vmatpush1.msra.mxu0 %v71
    %266 = vmatprep.subr.mxu0 0.0
    %267 = vmatpush1.msra.mxu0 %v72
    %268 = vmatprep.subr.mxu0 0.0
    %269 = vmatpush1.msra.mxu0 %v73
    %270 = vmatprep.subr.mxu0 0.0
    %271 = vmatpush1.msra.mxu0 %v74
    %272 = vmatprep.subr.mxu0 0.0
    %273 = vmatpush1.msra.mxu0 0.0
    %274 = vmatprep.subr.mxu0 0.0
    %275 = vmatpush1.msra.mxu0 0.0
    %276 = vmatprep.subr.mxu0 0.0
    %277 = vmatpush1.msra.mxu0 0.0
    %278 = vmatprep.subr.mxu0 0.0
    %279 = vmatpush1.msra.mxu0 0.0
    %280 = vmatprep.subr.mxu0 0.0
    %281 = vmatpush1.msra.mxu0 0.0
    %282 = vmatprep.subr.mxu0 0.0
    %283 = vmatpush1.msra.mxu0 0.0
    %284 = vmatprep.subr.mxu0 0.0
    %285 = vmatpush1.msra.mxu0 0.0
    %286 = vmatprep.subr.mxu0 0.0
    %287 = vmatpush1.msra.mxu0 0.0
    %288 = vmatprep.subr.mxu0 0.0
    %289 = vmatpush1.msra.mxu0 0.0
    %290 = vmatprep.subr.mxu0 0.0
    %291 = vmatpush1.msra.mxu0 0.0
    %292 = vmatprep.subr.mxu0 0.0
    %293 = vmatpush1.msra.mxu0 0.0
    %294 = vmatprep.subr.mxu0 0.0
    %295 = vmatpush1.msra.mxu0 0.0
    %296 = vmatprep.subr.mxu0 0.0
    %297 = vmatpush1.msra.mxu0 0.0
    %298 = vmatprep.subr.mxu0 0.0
    %299 = vmatpush1.msra.mxu0 0.0
    %300 = vmatprep.subr.mxu0 0.0
    %301 = vmatpush1.msra.mxu0 0.0
    %302 = vmatprep.subr.mxu0 0.0
    %303 = vmatpush1.msra.mxu0 0.0
    %304 = vmatprep.mubr.f32.mxu0 0.0
    %305 = vmatmul.mubr.f32.gmra.mrb[0].mxu0 %v235
    %v306 = vpop.f32.mrb[0].mxu0
    %v307 = vadd.f32 %v239, %v306
    %v308 = vpop.f32.mrb[0].mxu0
    %309 = vdwg.mxu0
    %v310 = vmax.f32 %v307, 0.0
    %v311 = vlaneseq
    %v312 = vshrl.u32 %v311, 7
    %v313 = vsub.s32 2, %v312
    %v314 = vrot.slane %v155, %v313
    %315 = vmatprep.subr.mxu0 0.0
    %316 = vmatpush1.msra.mxu0 %v75
    %317 = vmatprep.subr.mxu0 0.0
    %318 = vmatpush1.msra.mxu0 %v76
    %319 = vmatprep.subr.mxu0 0.0
    %320 = vmatpush1.msra.mxu0 %v77
    %321 = vmatprep.subr.mxu0 0.0
    %322 = vmatpush1.msra.mxu0 %v78
    %323 = vmatprep.subr.mxu0 0.0
    %324 = vmatpush1.msra.mxu0 %v79
    %325 = vmatprep.subr.mxu0 0.0
    %326 = vmatpush1.msra.mxu0 %v80
    %327 = vmatprep.subr.mxu0 0.0
    %328 = vmatpush1.msra.mxu0 %v81
    %329 = vmatprep.subr.mxu0 0.0
    %330 = vmatpush1.msra.mxu0 %v82
    %331 = vmatprep.subr.mxu0 0.0
    %332 = vmatpush1.msra.mxu0 %v83
    %333 = vmatprep.subr.mxu0 0.0
    %334 = vmatpush1.msra.mxu0 %v84
    %335 = vmatprep.subr.mxu0 0.0
    %336 = vmatpush1.msra.mxu0 %v85
    %337 = vmatprep.subr.mxu0 0.0
    %338 = vmatpush1.msra.mxu0 %v86
    %339 = vmatprep.subr.mxu0 0.0
    %340 = vmatpush1.msra.mxu0 %v87
    %341 = vmatprep.subr.mxu0 0.0
    %342 = vmatpush1.msra.mxu0 %v88
    %343 = vmatprep.subr.mxu0 0.0
    %344 = vmatpush1.msra.mxu0 %v89
    %345 = vmatprep.subr.mxu0 0.0
    %346 = vmatpush1.msra.mxu0 %v90
    %347 = vmatprep.subr.mxu0 0.0
    %348 = vmatpush1.msra.mxu0 0.0
    %349 = vmatprep.subr.mxu0 0.0
    %350 = vmatpush1.msra.mxu0 0.0
    %351 = vmatprep.subr.mxu0 0.0
    %352 = vmatpush1.msra.mxu0 0.0
    %353 = vmatprep.subr.mxu0 0.0
    %354 = vmatpush1.msra.mxu0 0.0
    %355 = vmatprep.subr.mxu0 0.0
    %356 = vmatpush1.msra.mxu0 0.0
    %357 = vmatprep.subr.mxu0 0.0
    %358 = vmatpush1.msra.mxu0 0.0
    %359 = vmatprep.subr.mxu0 0.0
    %360 = vmatpush1.msra.mxu0 0.0
    %361 = vmatprep.subr.mxu0 0.0
    %362 = vmatpush1.msra.mxu0 0.0
    %363 = vmatprep.subr.mxu0 0.0
    %364 = vmatpush1.msra.mxu0 0.0
    %365 = vmatprep.subr.mxu0 0.0
    %366 = vmatpush1.msra.mxu0 0.0
    %367 = vmatprep.subr.mxu0 0.0
    %368 = vmatpush1.msra.mxu0 0.0
    %369 = vmatprep.subr.mxu0 0.0
    %370 = vmatpush1.msra.mxu0 0.0
    %371 = vmatprep.subr.mxu0 0.0
    %372 = vmatpush1.msra.mxu0 0.0
    %373 = vmatprep.subr.mxu0 0.0
    %374 = vmatpush1.msra.mxu0 0.0
    %375 = vmatprep.subr.mxu0 0.0
    %376 = vmatpush1.msra.mxu0 0.0
    %377 = vmatprep.subr.mxu0 0.0
    %378 = vmatpush1.msra.mxu0 0.0
    %379 = vmatprep.mubr.f32.mxu0 0.0
    %380 = vmatmul.mubr.f32.gmra.mrb[0].mxu0 %v310
    %v381 = vpop.f32.mrb[0].mxu0
    %v382 = vadd.f32 %v314, %v381
    %v383 = vpop.f32.mrb[0].mxu0
    %384 = vdwg.mxu0
    %v385 = vmax.f32 %v382, 0.0
    %v386 = vlaneseq
    %v387 = vshrl.u32 %v386, 7
    %v388 = vsub.s32 3, %v387
    %v389 = vrot.slane %v155, %v388
    %390 = vmatprep.subr.mxu0 0.0
    %391 = vmatpush1.msra.mxu0 %v91
    %392 = vmatprep.subr.mxu0 0.0
    %393 = vmatpush1.msra.mxu0 %v92
    %394 = vmatprep.subr.mxu0 0.0
    %395 = vmatpush1.msra.mxu0 %v93
    %396 = vmatprep.subr.mxu0 0.0
    %397 = vmatpush1.msra.mxu0 %v94
    %398 = vmatprep.subr.mxu0 0.0
    %399 = vmatpush1.msra.mxu0 %v95
    %400 = vmatprep.subr.mxu0 0.0
    %401 = vmatpush1.msra.mxu0 %v96
    %402 = vmatprep.subr.mxu0 0.0
    %403 = vmatpush1.msra.mxu0 %v97
    %404 = vmatprep.subr.mxu0 0.0
    %405 = vmatpush1.msra.mxu0 %v98
    %406 = vmatprep.subr.mxu0 0.0
    %407 = vmatpush1.msra.mxu0 %v99
    %408 = vmatprep.subr.mxu0 0.0
    %409 = vmatpush1.msra.mxu0 %v100
    %410 = vmatprep.subr.mxu0 0.0
    %411 = vmatpush1.msra.mxu0 %v101
    %412 = vmatprep.subr.mxu0 0.0
    %413 = vmatpush1.msra.mxu0 %v102
    %414 = vmatprep.subr.mxu0 0.0
    %415 = vmatpush1.msra.mxu0 %v103
    %416 = vmatprep.subr.mxu0 0.0
    %417 = vmatpush1.msra.mxu0 %v104
    %418 = vmatprep.subr.mxu0 0.0
    %419 = vmatpush1.msra.mxu0 %v105
    %420 = vmatprep.subr.mxu0 0.0
    %421 = vmatpush1.msra.mxu0 %v106
    %422 = vmatprep.subr.mxu0 0.0
    %423 = vmatpush1.msra.mxu0 0.0
    %424 = vmatprep.subr.mxu0 0.0
    %425 = vmatpush1.msra.mxu0 0.0
    %426 = vmatprep.subr.mxu0 0.0
    %427 = vmatpush1.msra.mxu0 0.0
    %428 = vmatprep.subr.mxu0 0.0
    %429 = vmatpush1.msra.mxu0 0.0
    %430 = vmatprep.subr.mxu0 0.0
    %431 = vmatpush1.msra.mxu0 0.0
    %432 = vmatprep.subr.mxu0 0.0
    %433 = vmatpush1.msra.mxu0 0.0
    %434 = vmatprep.subr.mxu0 0.0
    %435 = vmatpush1.msra.mxu0 0.0
    %436 = vmatprep.subr.mxu0 0.0
    %437 = vmatpush1.msra.mxu0 0.0
    %438 = vmatprep.subr.mxu0 0.0
    %439 = vmatpush1.msra.mxu0 0.0
    %440 = vmatprep.subr.mxu0 0.0
    %441 = vmatpush1.msra.mxu0 0.0
    %442 = vmatprep.subr.mxu0 0.0
    %443 = vmatpush1.msra.mxu0 0.0
    %444 = vmatprep.subr.mxu0 0.0
    %445 = vmatpush1.msra.mxu0 0.0
    %446 = vmatprep.subr.mxu0 0.0
    %447 = vmatpush1.msra.mxu0 0.0
    %448 = vmatprep.subr.mxu0 0.0
    %449 = vmatpush1.msra.mxu0 0.0
    %450 = vmatprep.subr.mxu0 0.0
    %451 = vmatpush1.msra.mxu0 0.0
    %452 = vmatprep.subr.mxu0 0.0
    %453 = vmatpush1.msra.mxu0 0.0
    %454 = vmatprep.mubr.f32.mxu0 0.0
    %455 = vmatmul.mubr.f32.gmra.mrb[0].mxu0 %v385
    %v456 = vpop.f32.mrb[0].mxu0
    %v457 = vadd.f32 %v389, %v456
    %v458 = vpop.f32.mrb[0].mxu0
    %459 = vdwg.mxu0
    %v460 = vmax.f32 %v457, 0.0
    %v461 = vlaneseq
    %v462 = vshrl.u32 %v461, 7
    %v463 = vsub.s32 5, %v462
    %v464 = vrot.slane %v155, %v463
    %465 = vmatprep.subr.mxu0 0.0
    %466 = vmatpush1.msra.mxu0 %v123
    %467 = vmatprep.subr.mxu0 0.0
    %468 = vmatpush1.msra.mxu0 %v124
    %469 = vmatprep.subr.mxu0 0.0
    %470 = vmatpush1.msra.mxu0 %v125
    %471 = vmatprep.subr.mxu0 0.0
    %472 = vmatpush1.msra.mxu0 %v126
    %473 = vmatprep.subr.mxu0 0.0
    %474 = vmatpush1.msra.mxu0 %v127
    %475 = vmatprep.subr.mxu0 0.0
    %476 = vmatpush1.msra.mxu0 %v128
    %477 = vmatprep.subr.mxu0 0.0
    %478 = vmatpush1.msra.mxu0 %v129
    %479 = vmatprep.subr.mxu0 0.0
    %480 = vmatpush1.msra.mxu0 %v130
    %481 = vmatprep.subr.mxu0 0.0
    %482 = vmatpush1.msra.mxu0 %v131
    %483 = vmatprep.subr.mxu0 0.0
    %484 = vmatpush1.msra.mxu0 %v132
    %485 = vmatprep.subr.mxu0 0.0
    %486 = vmatpush1.msra.mxu0 %v133
    %487 = vmatprep.subr.mxu0 0.0
    %488 = vmatpush1.msra.mxu0 %v134
    %489 = vmatprep.subr.mxu0 0.0
    %490 = vmatpush1.msra.mxu0 %v135
    %491 = vmatprep.subr.mxu0 0.0
    %492 = vmatpush1.msra.mxu0 %v136
    %493 = vmatprep.subr.mxu0 0.0
    %494 = vmatpush1.msra.mxu0 %v137
    %495 = vmatprep.subr.mxu0 0.0
    %496 = vmatpush1.msra.mxu0 %v138
    %497 = vmatprep.subr.mxu0 0.0
    %498 = vmatpush1.msra.mxu0 0.0
    %499 = vmatprep.subr.mxu0 0.0
    %500 = vmatpush1.msra.mxu0 0.0
    %501 = vmatprep.subr.mxu0 0.0
    %502 = vmatpush1.msra.mxu0 0.0
    %503 = vmatprep.subr.mxu0 0.0
    %504 = vmatpush1.msra.mxu0 0.0
    %505 = vmatprep.subr.mxu0 0.0
    %506 = vmatpush1.msra.mxu0 0.0
    %507 = vmatprep.subr.mxu0 0.0
    %508 = vmatpush1.msra.mxu0 0.0
    %509 = vmatprep.subr.mxu0 0.0
    %510 = vmatpush1.msra.mxu0 0.0
    %511 = vmatprep.subr.mxu0 0.0
    %512 = vmatpush1.msra.mxu0 0.0
    %513 = vmatprep.subr.mxu0 0.0
    %514 = vmatpush1.msra.mxu0 0.0
    %515 = vmatprep.subr.mxu0 0.0
    %516 = vmatpush1.msra.mxu0 0.0
    %517 = vmatprep.subr.mxu0 0.0
    %518 = vmatpush1.msra.mxu0 0.0
    %519 = vmatprep.subr.mxu0 0.0
    %520 = vmatpush1.msra.mxu0 0.0
    %521 = vmatprep.subr.mxu0 0.0
    %522 = vmatpush1.msra.mxu0 0.0
    %523 = vmatprep.subr.mxu0 0.0
    %524 = vmatpush1.msra.mxu0 0.0
    %525 = vmatprep.subr.mxu0 0.0
    %526 = vmatpush1.msra.mxu0 0.0
    %527 = vmatprep.subr.mxu0 0.0
    %528 = vmatpush1.msra.mxu0 0.0
    %529 = vmatprep.mubr.f32.mxu0 0.0
    %530 = vmatmul.mubr.f32.gmra.mrb[0].mxu0 %v385
    %v531 = vpop.f32.mrb[0].mxu0
    %v532 = vadd.f32 %v464, %v531
    %v533 = vpop.f32.mrb[0].mxu0
    %534 = vdwg.mxu0
    %v535 = vmax.f32 %v532, 0.0
    %v536 = vlaneseq
    %v537 = vshrl.u32 %v536, 7
    %v538 = vsub.s32 4, %v537
    %v539 = vrot.slane %v155, %v538
    %540 = vmatprep.subr.mxu0 0.0
    %541 = vmatpush1.msra.mxu0 %v107
    %542 = vmatprep.subr.mxu0 0.0
    %543 = vmatpush1.msra.mxu0 %v108
    %544 = vmatprep.subr.mxu0 0.0
    %545 = vmatpush1.msra.mxu0 %v109
    %546 = vmatprep.subr.mxu0 0.0
    %547 = vmatpush1.msra.mxu0 %v110
    %548 = vmatprep.subr.mxu0 0.0
    %549 = vmatpush1.msra.mxu0 %v111
    %550 = vmatprep.subr.mxu0 0.0
    %551 = vmatpush1.msra.mxu0 %v112
    %552 = vmatprep.subr.mxu0 0.0
    %553 = vmatpush1.msra.mxu0 %v113
    %554 = vmatprep.subr.mxu0 0.0
    %555 = vmatpush1.msra.mxu0 %v114
    %556 = vmatprep.subr.mxu0 0.0
    %557 = vmatpush1.msra.mxu0 %v115
    %558 = vmatprep.subr.mxu0 0.0
    %559 = vmatpush1.msra.mxu0 %v116
    %560 = vmatprep.subr.mxu0 0.0
    %561 = vmatpush1.msra.mxu0 %v117
    %562 = vmatprep.subr.mxu0 0.0
    %563 = vmatpush1.msra.mxu0 %v118
    %564 = vmatprep.subr.mxu0 0.0
    %565 = vmatpush1.msra.mxu0 %v119
    %566 = vmatprep.subr.mxu0 0.0
    %567 = vmatpush1.msra.mxu0 %v120
    %568 = vmatprep.subr.mxu0 0.0
    %569 = vmatpush1.msra.mxu0 %v121
    %570 = vmatprep.subr.mxu0 0.0
    %571 = vmatpush1.msra.mxu0 %v122
    %572 = vmatprep.subr.mxu0 0.0
    %573 = vmatpush1.msra.mxu0 0.0
    %574 = vmatprep.subr.mxu0 0.0
    %575 = vmatpush1.msra.mxu0 0.0
    %576 = vmatprep.subr.mxu0 0.0
    %577 = vmatpush1.msra.mxu0 0.0
    %578 = vmatprep.subr.mxu0 0.0
    %579 = vmatpush1.msra.mxu0 0.0
    %580 = vmatprep.subr.mxu0 0.0
    %581 = vmatpush1.msra.mxu0 0.0
    %582 = vmatprep.subr.mxu0 0.0
    %583 = vmatpush1.msra.mxu0 0.0
    %584 = vmatprep.subr.mxu0 0.0
    %585 = vmatpush1.msra.mxu0 0.0
    %586 = vmatprep.subr.mxu0 0.0
    %587 = vmatpush1.msra.mxu0 0.0
    %588 = vmatprep.subr.mxu0 0.0
    %589 = vmatpush1.msra.mxu0 0.0
    %590 = vmatprep.subr.mxu0 0.0
    %591 = vmatpush1.msra.mxu0 0.0
    %592 = vmatprep.subr.mxu0 0.0
    %593 = vmatpush1.msra.mxu0 0.0
    %594 = vmatprep.subr.mxu0 0.0
    %595 = vmatpush1.msra.mxu0 0.0
    %596 = vmatprep.subr.mxu0 0.0
    %597 = vmatpush1.msra.mxu0 0.0
    %598 = vmatprep.subr.mxu0 0.0
    %599 = vmatpush1.msra.mxu0 0.0
    %600 = vmatprep.subr.mxu0 0.0
    %601 = vmatpush1.msra.mxu0 0.0
    %602 = vmatprep.subr.mxu0 0.0
    %603 = vmatpush1.msra.mxu0 0.0
    %604 = vmatprep.mubr.f32.mxu0 0.0
    %605 = vmatmul.mubr.f32.gmra.mrb[0].mxu0 %v460
    %v606 = vpop.f32.mrb[0].mxu0
    %v607 = vadd.f32 %v539, %v606
    %v608 = vpop.f32.mrb[0].mxu0
    %609 = vdwg.mxu0
    %v610 = vlaneseq
    %v611 = vshrl.u32 %v610, 7
    %v612 = vsub.s32 6, %v611
    %v613 = vrot.slane %v155, %v612
    %614 = vmatprep.subr.mxu0 0.0
    %615 = vmatpush1.msra.mxu0 %v139
    %616 = vmatprep.subr.mxu0 0.0
    %617 = vmatpush1.msra.mxu0 %v140
    %618 = vmatprep.subr.mxu0 0.0
    %619 = vmatpush1.msra.mxu0 %v141
    %620 = vmatprep.subr.mxu0 0.0
    %621 = vmatpush1.msra.mxu0 %v142
    %622 = vmatprep.subr.mxu0 0.0
    %623 = vmatpush1.msra.mxu0 %v143
    %624 = vmatprep.subr.mxu0 0.0
    %625 = vmatpush1.msra.mxu0 %v144
    %626 = vmatprep.subr.mxu0 0.0
    %627 = vmatpush1.msra.mxu0 %v145
    %628 = vmatprep.subr.mxu0 0.0
    %629 = vmatpush1.msra.mxu0 %v146
    %630 = vmatprep.subr.mxu0 0.0
    %631 = vmatpush1.msra.mxu0 %v147
    %632 = vmatprep.subr.mxu0 0.0
    %633 = vmatpush1.msra.mxu0 %v148
    %634 = vmatprep.subr.mxu0 0.0
    %635 = vmatpush1.msra.mxu0 %v149
    %636 = vmatprep.subr.mxu0 0.0
    %637 = vmatpush1.msra.mxu0 %v150
    %638 = vmatprep.subr.mxu0 0.0
    %639 = vmatpush1.msra.mxu0 %v151
    %640 = vmatprep.subr.mxu0 0.0
    %641 = vmatpush1.msra.mxu0 %v152
    %642 = vmatprep.subr.mxu0 0.0
    %643 = vmatpush1.msra.mxu0 %v153
    %644 = vmatprep.subr.mxu0 0.0
    %645 = vmatpush1.msra.mxu0 %v154
    %646 = vmatprep.subr.mxu0 0.0
    %647 = vmatpush1.msra.mxu0 0.0
    %648 = vmatprep.subr.mxu0 0.0
    %649 = vmatpush1.msra.mxu0 0.0
    %650 = vmatprep.subr.mxu0 0.0
    %651 = vmatpush1.msra.mxu0 0.0
    %652 = vmatprep.subr.mxu0 0.0
    %653 = vmatpush1.msra.mxu0 0.0
    %654 = vmatprep.subr.mxu0 0.0
    %655 = vmatpush1.msra.mxu0 0.0
    %656 = vmatprep.subr.mxu0 0.0
    %657 = vmatpush1.msra.mxu0 0.0
    %658 = vmatprep.subr.mxu0 0.0
    %659 = vmatpush1.msra.mxu0 0.0
    %660 = vmatprep.subr.mxu0 0.0
    %661 = vmatpush1.msra.mxu0 0.0
    %662 = vmatprep.subr.mxu0 0.0
    %663 = vmatpush1.msra.mxu0 0.0
    %664 = vmatprep.subr.mxu0 0.0
    %665 = vmatpush1.msra.mxu0 0.0
    %666 = vmatprep.subr.mxu0 0.0
    %667 = vmatpush1.msra.mxu0 0.0
    %668 = vmatprep.subr.mxu0 0.0
    %669 = vmatpush1.msra.mxu0 0.0
    %670 = vmatprep.subr.mxu0 0.0
    %671 = vmatpush1.msra.mxu0 0.0
    %672 = vmatprep.subr.mxu0 0.0
    %673 = vmatpush1.msra.mxu0 0.0
    %674 = vmatprep.subr.mxu0 0.0
    %675 = vmatpush1.msra.mxu0 0.0
    %676 = vmatprep.subr.mxu0 0.0
    %677 = vmatpush1.msra.mxu0 0.0
    %678 = vmatprep.mubr.f32.mxu0 0.0
    %679 = vmatmul.mubr.f32.gmra.mrb[0].mxu0 %v535
    %v680 = vpop.f32.mrb[0].mxu0
    %v681 = vadd.f32 %v613, %v680
    %v682 = vpop.f32.mrb[0].mxu0
    %683 = vdwg.mxu0
    %684 = vst [vmem:[#allocation9] sm:$0xff] %v681
    %v685 = vadd.f32 %v607, %v681
    %686 = vst [vmem:[#allocation8] sm:$0xff] %v685
    // Predicated region
    $region30: #{tpu_custom_call.1} parent=1 // pred_check
      _
    $region31: #{tpu_custom_call.1} parent=1 // pred_check_branch
      %688 = sbr.rel (0) target = $region33
    $region32: #{tpu_custom_call.1} parent=1 // pred_region
      %s690 = ssub.s32 128, 128
      %691 = vsyncadd [#allocation4], %s690
      %s693 = sshll.u32 [#allocation8], 4
      %s694 = int_to_ptr.vmem [resolvable:$true] %s693
      %696 = dma.vmem_to_hbm [thread:$0]  %s694, 128, %s4, [#allocation4]
    $region33: #{tpu_custom_call.1} parent=1 // pred_fallthru
      _
    // Predicated region
    $region34: #{tpu_custom_call.1} parent=1 // pred_check
      _
    $region35: #{tpu_custom_call.1} parent=1 // pred_check_branch
      %698 = sbr.rel (0) target = $region37
    $region36: #{tpu_custom_call.1} parent=1 // pred_region
      %s700 = ssub.s32 128, 128
      %701 = vsyncadd [#allocation10], %s700
      %s703 = sshll.u32 [#allocation9], 4
      %s704 = int_to_ptr.vmem [resolvable:$true] %s703
      %706 = dma.vmem_to_hbm [thread:$0]  %s704, 128, %s5, [#allocation10]
    $region37: #{tpu_custom_call.1} parent=1 // pred_fallthru
      _
    // Predicated region
    $region38: #{tpu_custom_call.1} parent=1 // pred_check
      _
    $region39: #{tpu_custom_call.1} parent=1 // pred_check_branch
      %708 = sbr.rel (0) target = $region41
    $region40: #{tpu_custom_call.1} parent=1 // pred_region
      %709 = dma.done [#allocation4], 128
    $region41: #{tpu_custom_call.1} parent=1 // pred_fallthru
      _
    // Predicated region
    $region42: #{tpu_custom_call.1} parent=1 // pred_check
      _
    $region43: #{tpu_custom_call.1} parent=1 // pred_check_branch
      %711 = sbr.rel (0) target = $region45
    $region44: #{tpu_custom_call.1} parent=1 // pred_region
      %712 = dma.done [#allocation10], 128
    $region45: #{tpu_custom_call.1} parent=1 // pred_fallthru
      _
    %713 = vsyncpa [#allocation3], 1
    %714 = vsyncpa [#allocation6], 1
    %715 = vsyncpa [#allocation4], 1
    %716 = vsyncpa [#allocation10], 1

</llo_original>
